<compile_context>
chip_gen: v6e
topology: v6e:2x2x1
jax: 0.10.0
libtpu: 0.0.40
codegen_flags: <defaults>
</compile_context>

<pallas_src>
import functools

import jax
import jax.numpy as jnp
from jax.experimental import pallas as pl
from jax.experimental.pallas import tpu as pltpu

LANES = 128          # lane-dense last dim (full vreg width, unmasked vld/vst)
BLOCK_ROWS = 2048    # 2048*128*4B = 1 MiB per f32 stream per block
ROW_ALIGN = 32       # sublane alignment valid for f32 / bf16 / int8 streams


def _round_up(x, m):
    return (x + m - 1) // m * m


def _store_partials(part_ref, pred, lv, gt, m, eps):
    """Write the (8, 128) per-lane partial sums for this block."""
    pred_c = jnp.maximum(pred, eps)
    gt_c = jnp.maximum(gt, eps)
    diff_log = jnp.log(gt_c) - jnp.log(pred_c)
    if m is not None:                      # m is {0,1}-valued float32
        diff_log = diff_log * m
        pred_c = pred_c * m
        gt_c = gt_c * m

    def lsum(x):                           # sublane-only reduction -> (1, 128)
        return jnp.sum(x, axis=0, keepdims=True)

    if m is None:
        nv = jnp.zeros((1, LANES), jnp.float32)   # n_valid handled statically
    else:
        nv = lsum(m)

    rows = (
        lsum(jnp.maximum(eps - pred, 0.0)),  # 0: sum relu(eps - pred), unmasked
        lsum(diff_log),                      # 1: sum diff_log          (masked)
        lsum(diff_log * diff_log),           # 2: sum diff_log^2        (masked)
        lsum(pred_c),                        # 3: sum clamped pred      (masked)
        lsum(gt_c),                          # 4: sum clamped gt        (masked)
        nv,                                  # 5: number of valid pixels
        lsum(jnp.exp(-lv)),                  # 6: sum exp(-logvar), unmasked
        lsum(lv),                            # 7: sum logvar,       unmasked
    )
    for k, v in enumerate(rows):
        part_ref[pl.ds(k, 1), :] = v


def _nll_silog_kernel_masked(pred_ref, lv_ref, gt_ref, mask_ref, part_ref, *, eps):
    _store_partials(part_ref,
                    pred_ref[...].astype(jnp.float32),
                    lv_ref[...].astype(jnp.float32),
                    gt_ref[...].astype(jnp.float32),
                    mask_ref[...].astype(jnp.float32),
                    eps)


def _nll_silog_kernel_nomask(pred_ref, lv_ref, gt_ref, part_ref, *, eps):
    _store_partials(part_ref,
                    pred_ref[...].astype(jnp.float32),
                    lv_ref[...].astype(jnp.float32),
                    gt_ref[...].astype(jnp.float32),
                    None,
                    eps)


def nll_silog_loss(pred_depth, pred_logvar, gt_depth, *,
                   eps=1e-6, valid_mask=None, penalty_weight=1.0,
                   lambd=0.5, zero_punish=1e6):
    """Pallas implementation of NLLSiLogLoss.forward.  Inputs are (B,1,H,W)."""
    eps = float(eps)
    n_pixels = 1
    for d in pred_depth.shape:
        n_pixels *= d

    rows = pl.cdiv(n_pixels, LANES)
    if rows <= BLOCK_ROWS:
        block_rows = _round_up(rows, ROW_ALIGN)
        padded_rows = block_rows
    else:
        block_rows = BLOCK_ROWS
        padded_rows = _round_up(rows, BLOCK_ROWS)
    grid = padded_rows // block_rows
    pad_count = padded_rows * LANES - n_pixels

    def to_slab(x, pad_value, dtype=None):
        v = x.reshape(-1)
        if dtype is not None:
            v = v.astype(dtype)
        if pad_count:
            v = jnp.pad(v, (0, pad_count), constant_values=pad_value)
        return v.reshape(padded_rows, LANES)

    # Pad values are chosen so padding contributes 0 to all masked sums, to the
    # relu(eps - pred) sum and to the logvar sum; the remaining exactly-known
    # padding contributions are subtracted in the finalize below.
    inputs = [to_slab(pred_depth, eps),      # clamp(pad)=eps, relu(eps-eps)=0
              to_slab(pred_logvar, 0.0),     # exp(-0)=1 per pad (corrected)
              to_slab(gt_depth, eps)]
    if valid_mask is not None:
        inputs.append(to_slab(valid_mask, 0, dtype=jnp.int8))
        kernel = functools.partial(_nll_silog_kernel_masked, eps=eps)
    else:
        kernel = functools.partial(_nll_silog_kernel_nomask, eps=eps)

    stream_spec = pl.BlockSpec((block_rows, LANES), lambda i: (i, 0))
    parts = pl.pallas_call(
        kernel,
        out_shape=jax.ShapeDtypeStruct((grid * 8, LANES), jnp.float32),
        grid_spec=pltpu.PrefetchScalarGridSpec(
            num_scalar_prefetch=0,
            grid=(grid,),
            in_specs=[stream_spec] * len(inputs),
            out_specs=pl.BlockSpec((8, LANES), lambda i: (i, 0)),
        ),
        compiler_params=pltpu.CompilerParams(
            dimension_semantics=("parallel",),
            vmem_limit_bytes=48 * 1024 * 1024),
    )(*inputs)

    # ---- finalize: one cross-lane/cross-block reduce + ~20 flops, in JAX ----
    totals = parts.reshape(grid, 8, LANES).sum(axis=(0, 2))
    zp_sum = totals[0]
    sum_d = totals[1]
    sum_d2 = totals[2]
    sum_pred = totals[3]
    sum_gt = totals[4]
    n_valid = totals[5]
    sum_exp_nlv = totals[6]
    sum_lv = totals[7]

    fpad = jnp.float32(pad_count)
    sum_exp_nlv = sum_exp_nlv - fpad            # pad logvar == 0 -> exp(0) == 1
    if valid_mask is None:
        n_valid = jnp.float32(n_pixels)
        sum_pred = sum_pred - fpad * eps        # pad pred/gt clamp to eps
        sum_gt = sum_gt - fpad * eps

    mean_d = sum_d / n_valid
    mean_d2 = sum_d2 / n_valid
    silog = jnp.sqrt(mean_d2 - lambd * mean_d * mean_d)
    penalty = penalty_weight * jnp.log(jnp.abs(sum_pred / n_valid
                                               - sum_gt / n_valid))
    diff = silog + penalty + zp_sum * zero_punish
    n_tot = jnp.float32(n_pixels)
    # mean(0.5 * exp(-logvar) * diff^2 + 0.5 * logvar) over all pixels
    return 0.5 * diff * diff * (sum_exp_nlv / n_tot) + 0.5 * (sum_lv / n_tot)


def nll_silog_loss_ref(pred_depth, pred_logvar, gt_depth, *,
                       eps=1e-6, valid_mask=None, penalty_weight=1.0,
                       lambd=0.5, zero_punish=1e6):
    """Pure-JAX reference mirroring the PyTorch module."""
    zero_punish_loss = jnp.sum(jax.nn.relu(eps - pred_depth))
    pred = jnp.maximum(pred_depth, eps)
    target = jnp.maximum(gt_depth, eps)
    if valid_mask is None:
        m = jnp.ones_like(pred)
    else:
        m = valid_mask.astype(pred.dtype)
    n = jnp.sum(m)
    diff_log = jnp.log(target) - jnp.log(pred)
    mean_d = jnp.sum(diff_log * m) / n
    mean_d2 = jnp.sum(diff_log * diff_log * m) / n
    silog = jnp.sqrt(mean_d2 - lambd * mean_d ** 2)
    silog = (silog
             + penalty_weight * jnp.log(jnp.abs(jnp.sum(pred * m) / n
                                                - jnp.sum(target * m) / n))
             + zero_punish_loss * zero_punish)
    loss = 0.5 * jnp.exp(-pred_logvar) * silog ** 2 + 0.5 * pred_logvar
    return jnp.mean(loss)


if __name__ == "__main__":
    # NLLSiLogLoss has no learnable parameters; lambd / zero_punish come from
    # __init__ defaults (0.5, 1e6).
    key = jax.random.PRNGKey(0)
    k1, k2, k3, k4 = jax.random.split(key, 4)

    B, C, H, W = 2, 1, 16, 16
    pred_depth = jax.random.uniform(k1, (B, C, H, W), jnp.float32,
                                    minval=0.1, maxval=5.0)
    gt_depth = jax.random.uniform(k2, (B, C, H, W), jnp.float32,
                                  minval=0.1, maxval=5.0)
    pred_logvar = 0.5 * jax.random.normal(k3, (B, C, H, W), jnp.float32)
    valid_mask = (jax.random.uniform(k4, (B, C, H, W)) > 0.2)

    # Masked path.
    out_m = jax.block_until_ready(
        nll_silog_loss(pred_depth, pred_logvar, gt_depth, valid_mask=valid_mask))
    ref_m = jax.block_until_ready(
        nll_silog_loss_ref(pred_depth, pred_logvar, gt_depth, valid_mask=valid_mask))
    assert jnp.isfinite(out_m), f"non-finite kernel output: {out_m}"
    assert jnp.allclose(out_m, ref_m, rtol=1e-4, atol=1e-4), (out_m, ref_m)

    # Unmasked (specialized, no mask stream) path.
    out_n = jax.block_until_ready(
        nll_silog_loss(pred_depth, pred_logvar, gt_depth))
    ref_n = jax.block_until_ready(
        nll_silog_loss_ref(pred_depth, pred_logvar, gt_depth))
    assert jnp.isfinite(out_n), f"non-finite kernel output: {out_n}"
    assert jnp.allclose(out_n, ref_n, rtol=1e-4, atol=1e-4), (out_n, ref_n)

    print("KERNEL_OK")
</pallas_src>

<mosaic_0001>
module attributes {stable_mosaic.version = 11 : i64} {
  func.func @_nll_silog_kernel_masked(%arg0: i32, %arg1: memref<32x128xf32, #tpu.memory_space<vmem>>, %arg2: memref<32x128xf32, #tpu.memory_space<vmem>>, %arg3: memref<32x128xf32, #tpu.memory_space<vmem>>, %arg4: memref<32x128xi8, #tpu.memory_space<vmem>>, %arg5: memref<8x128xf32, #tpu.memory_space<vmem>>) attributes {dimension_semantics = [#tpu.dimension_semantics<parallel>], iteration_bounds = array<i64: 1>, scalar_prefetch = 0 : i64, scratch_operands = 0 : i64, tpu.core_type = #tpu.core_type<tc>, window_params = [{transform_indices = @transform_0, window_bounds = array<i64: 32, 128>}, {transform_indices = @transform_1, window_bounds = array<i64: 32, 128>}, {transform_indices = @transform_2, window_bounds = array<i64: 32, 128>}, {transform_indices = @transform_3, window_bounds = array<i64: 32, 128>}, {transform_indices = @transform_4, window_bounds = array<i64: 8, 128>}]} {
    %c0 = arith.constant 0 : index
    %c0_0 = arith.constant 0 : index
    %0 = vector.load %arg1[%c0, %c0_0] : memref<32x128xf32, #tpu.memory_space<vmem>>, vector<32x128xf32>
    %c0_1 = arith.constant 0 : index
    %c0_2 = arith.constant 0 : index
    %1 = vector.load %arg2[%c0_1, %c0_2] : memref<32x128xf32, #tpu.memory_space<vmem>>, vector<32x128xf32>
    %c0_3 = arith.constant 0 : index
    %c0_4 = arith.constant 0 : index
    %2 = vector.load %arg3[%c0_3, %c0_4] : memref<32x128xf32, #tpu.memory_space<vmem>>, vector<32x128xf32>
    %c0_5 = arith.constant 0 : index
    %c0_6 = arith.constant 0 : index
    %3 = vector.load %arg4[%c0_5, %c0_6] : memref<32x128xi8, #tpu.memory_space<vmem>>, vector<32x128xi8>
    %4 = arith.sitofp %3 : vector<32x128xi8> to vector<32x128xf32>
    %cst = arith.constant 9.99999997E-7 : f32
    %5 = vector.broadcast %cst : f32 to vector<32x128xf32>
    %6 = arith.maximumf %0, %5 : vector<32x128xf32>
    %cst_7 = arith.constant 9.99999997E-7 : f32
    %7 = vector.broadcast %cst_7 : f32 to vector<32x128xf32>
    %8 = arith.maximumf %2, %7 : vector<32x128xf32>
    %9 = math.log %8 : vector<32x128xf32>
    %10 = math.log %6 : vector<32x128xf32>
    %11 = arith.subf %9, %10 : vector<32x128xf32>
    %12 = arith.mulf %11, %4 : vector<32x128xf32>
    %13 = arith.mulf %6, %4 : vector<32x128xf32>
    %14 = arith.mulf %8, %4 : vector<32x128xf32>
    %cst_8 = arith.constant dense<0.000000e+00> : vector<128xf32>
    %15 = vector.multi_reduction <add>, %4, %cst_8 [0] : vector<32x128xf32> to vector<128xf32>
    %16 = vector.shape_cast %15 : vector<128xf32> to vector<1x128xf32>
    %cst_9 = arith.constant 9.99999997E-7 : f32
    %17 = vector.broadcast %cst_9 : f32 to vector<32x128xf32>
    %18 = arith.subf %17, %0 : vector<32x128xf32>
    %cst_10 = arith.constant 0.000000e+00 : f32
    %19 = vector.broadcast %cst_10 : f32 to vector<32x128xf32>
    %20 = arith.maximumf %18, %19 : vector<32x128xf32>
    %cst_11 = arith.constant dense<0.000000e+00> : vector<128xf32>
    %21 = vector.multi_reduction <add>, %20, %cst_11 [0] : vector<32x128xf32> to vector<128xf32>
    %22 = vector.shape_cast %21 : vector<128xf32> to vector<1x128xf32>
    %cst_12 = arith.constant dense<0.000000e+00> : vector<128xf32>
    %23 = vector.multi_reduction <add>, %12, %cst_12 [0] : vector<32x128xf32> to vector<128xf32>
    %24 = vector.shape_cast %23 : vector<128xf32> to vector<1x128xf32>
    %25 = arith.mulf %12, %12 : vector<32x128xf32>
    %cst_13 = arith.constant dense<0.000000e+00> : vector<128xf32>
    %26 = vector.multi_reduction <add>, %25, %cst_13 [0] : vector<32x128xf32> to vector<128xf32>
    %27 = vector.shape_cast %26 : vector<128xf32> to vector<1x128xf32>
    %cst_14 = arith.constant dense<0.000000e+00> : vector<128xf32>
    %28 = vector.multi_reduction <add>, %13, %cst_14 [0] : vector<32x128xf32> to vector<128xf32>
    %29 = vector.shape_cast %28 : vector<128xf32> to vector<1x128xf32>
    %cst_15 = arith.constant dense<0.000000e+00> : vector<128xf32>
    %30 = vector.multi_reduction <add>, %14, %cst_15 [0] : vector<32x128xf32> to vector<128xf32>
    %31 = vector.shape_cast %30 : vector<128xf32> to vector<1x128xf32>
    %cst_16 = arith.constant 0.000000e+00 : f32
    %32 = vector.broadcast %cst_16 : f32 to vector<32x128xf32>
    %33 = arith.subf %32, %1 : vector<32x128xf32>
    %34 = math.exp %33 : vector<32x128xf32>
    %cst_17 = arith.constant dense<0.000000e+00> : vector<128xf32>
    %35 = vector.multi_reduction <add>, %34, %cst_17 [0] : vector<32x128xf32> to vector<128xf32>
    %36 = vector.shape_cast %35 : vector<128xf32> to vector<1x128xf32>
    %cst_18 = arith.constant dense<0.000000e+00> : vector<128xf32>
    %37 = vector.multi_reduction <add>, %1, %cst_18 [0] : vector<32x128xf32> to vector<128xf32>
    %38 = vector.shape_cast %37 : vector<128xf32> to vector<1x128xf32>
    %c0_19 = arith.constant 0 : index
    %c0_20 = arith.constant 0 : index
    %39 = vector.load %arg5[%c0_19, %c0_20] : memref<8x128xf32, #tpu.memory_space<vmem>>, vector<1x128xf32>
    tpu.vector_store %arg5[%c0_19, %c0_20], %22 {strides = array<i32>} : memref<8x128xf32, #tpu.memory_space<vmem>>, vector<1x128xf32>,
    %c1 = arith.constant 1 : index
    %c0_21 = arith.constant 0 : index
    %40 = vector.load %arg5[%c1, %c0_21] : memref<8x128xf32, #tpu.memory_space<vmem>>, vector<1x128xf32>
    tpu.vector_store %arg5[%c1, %c0_21], %24 {strides = array<i32>} : memref<8x128xf32, #tpu.memory_space<vmem>>, vector<1x128xf32>,
    %c2 = arith.constant 2 : index
    %c0_22 = arith.constant 0 : index
    %41 = vector.load %arg5[%c2, %c0_22] : memref<8x128xf32, #tpu.memory_space<vmem>>, vector<1x128xf32>
    tpu.vector_store %arg5[%c2, %c0_22], %27 {strides = array<i32>} : memref<8x128xf32, #tpu.memory_space<vmem>>, vector<1x128xf32>,
    %c3 = arith.constant 3 : index
    %c0_23 = arith.constant 0 : index
    %42 = vector.load %arg5[%c3, %c0_23] : memref<8x128xf32, #tpu.memory_space<vmem>>, vector<1x128xf32>
    tpu.vector_store %arg5[%c3, %c0_23], %29 {strides = array<i32>} : memref<8x128xf32, #tpu.memory_space<vmem>>, vector<1x128xf32>,
    %c4 = arith.constant 4 : index
    %c0_24 = arith.constant 0 : index
    %43 = vector.load %arg5[%c4, %c0_24] : memref<8x128xf32, #tpu.memory_space<vmem>>, vector<1x128xf32>
    tpu.vector_store %arg5[%c4, %c0_24], %31 {strides = array<i32>} : memref<8x128xf32, #tpu.memory_space<vmem>>, vector<1x128xf32>,
    %c5 = arith.constant 5 : index
    %c0_25 = arith.constant 0 : index
    %44 = vector.load %arg5[%c5, %c0_25] : memref<8x128xf32, #tpu.memory_space<vmem>>, vector<1x128xf32>
    tpu.vector_store %arg5[%c5, %c0_25], %16 {strides = array<i32>} : memref<8x128xf32, #tpu.memory_space<vmem>>, vector<1x128xf32>,
    %c6 = arith.constant 6 : index
    %c0_26 = arith.constant 0 : index
    %45 = vector.load %arg5[%c6, %c0_26] : memref<8x128xf32, #tpu.memory_space<vmem>>, vector<1x128xf32>
    tpu.vector_store %arg5[%c6, %c0_26], %36 {strides = array<i32>} : memref<8x128xf32, #tpu.memory_space<vmem>>, vector<1x128xf32>,
    %c7 = arith.constant 7 : index
    %c0_27 = arith.constant 0 : index
    %46 = vector.load %arg5[%c7, %c0_27] : memref<8x128xf32, #tpu.memory_space<vmem>>, vector<1x128xf32>
    tpu.vector_store %arg5[%c7, %c0_27], %38 {strides = array<i32>} : memref<8x128xf32, #tpu.memory_space<vmem>>, vector<1x128xf32>,
    return
  }
  func.func @transform_0(%arg0: i32) -> (i32, i32) {
    %c0_i32 = arith.constant 0 : i32
    %c0_i32_0 = arith.constant 0 : i32
    return %arg0, %c0_i32 : i32, i32
  }
  func.func @transform_1(%arg0: i32) -> (i32, i32) {
    %c0_i32 = arith.constant 0 : i32
    %c0_i32_0 = arith.constant 0 : i32
    return %arg0, %c0_i32 : i32, i32
  }
  func.func @transform_2(%arg0: i32) -> (i32, i32) {
    %c0_i32 = arith.constant 0 : i32
    %c0_i32_0 = arith.constant 0 : i32
    return %arg0, %c0_i32 : i32, i32
  }
  func.func @transform_3(%arg0: i32) -> (i32, i32) {
    %c0_i32 = arith.constant 0 : i32
    %c0_i32_0 = arith.constant 0 : i32
    return %arg0, %c0_i32 : i32, i32
  }
  func.func @transform_4(%arg0: i32) -> (i32, i32) {
    %c0_i32 = arith.constant 0 : i32
    %c0_i32_0 = arith.constant 0 : i32
    return %arg0, %c0_i32 : i32, i32
  }
}

</mosaic_0001>

<llo_original>
// kernel: tpu_custom_call.1
$region0: #{tpu_custom_call.1}
  #allocation0 [shape = 'u32[]', space=smem, size = 0x4, offset = 0x4, fixed_abs, tag = 'smem constant byte address 0x4 - core index']
  #allocation1 [shape = 'u32[144,128]{1,0:T(1,128)}', space=vmem, size = 0x12000, scoped, tag = 'internal scratch']
  %s0 = inlined_call_operand.hbm [shape: f32[32,128], index: 0, kind: input, shape index: {}]
  %s1 = inlined_call_operand.hbm [shape: f32[32,128], index: 1, kind: input, shape index: {}]
  %s2 = inlined_call_operand.hbm [shape: f32[32,128], index: 2, kind: input, shape index: {}]
  %s3 = inlined_call_operand.hbm [shape: s8[32,128], index: 3, kind: input, shape index: {}]
  %s4 = inlined_call_operand.hbm [shape: f32[8,128], index: 4, kind: output, shape index: {}]
  %s5 = sld [smem:[#allocation0]]
  $region42: #{tpu_custom_call.1} parent=0
    _
  %s7 = ssub.s32 1, %s5
  %s8 = scalar_select 0, %s7, %s5
  $region1: #{tpu_custom_call.1} parent=0
    #allocation2 [shape = 'u8[16384]{0}', space=vmem, size = 0x4000, scoped, tag = 'input window, operand 0, single buffered']
    #allocation3 [shape = 's32[1]{0}', space=sflag, size = 0x4, scoped, tag = 'scoped memory for tpu_custom_call.1']
    #allocation4 [shape = 's32[1]{0}', space=sflag, size = 0x4, scoped, tag = 'scoped memory for tpu_custom_call.1']
    #allocation5 [shape = 'u8[16384]{0}', space=vmem, size = 0x4000, scoped, tag = 'input window, operand 1, single buffered']
    #allocation6 [shape = 's32[1]{0}', space=sflag, size = 0x4, scoped, tag = 'scoped memory for tpu_custom_call.1']
    #allocation7 [shape = 'u8[16384]{0}', space=vmem, size = 0x4000, scoped, tag = 'input window, operand 2, single buffered']
    #allocation8 [shape = 'u8[4096]{0}', space=vmem, size = 0x1000, scoped, tag = 'input window, operand 3, single buffered']
    #allocation9 [shape = 's32[1]{0}', space=sflag, size = 0x4, scoped, tag = 'scoped memory for tpu_custom_call.1']
    #allocation10 [shape = 'u8[4096]{0}', space=vmem, size = 0x1000, scoped, tag = 'output window, operand 0, single buffered']
    %9 = vsyncpa [#allocation3], 0
    %10 = vsyncpa [#allocation6], 0
    %11 = vsyncpa [#allocation9], 0
    %12 = vsyncpa [#allocation4], 0
    // Predicated region
    $region2: #{tpu_custom_call.1} parent=1 // pred_check
      _
    $region3: #{tpu_custom_call.1} parent=1 // pred_check_branch
      %14 = sbr.rel (0) target = $region5
    $region4: #{tpu_custom_call.1} parent=1 // pred_region
      %s16 = ssub.s32 512, 512
      %17 = vsyncadd [#allocation3], %s16
      %s18 = sshll.u32 [#allocation2], 4
      %s19 = int_to_ptr.vmem [resolvable:$true] %s18
      %24 = dma.hbm_to_vmem [thread:$0]  %s0, 512, %s19, [#allocation3], 128, 128, 8
    $region5: #{tpu_custom_call.1} parent=1 // pred_fallthru
      _
    // Predicated region
    $region6: #{tpu_custom_call.1} parent=1 // pred_check
      _
    $region7: #{tpu_custom_call.1} parent=1 // pred_check_branch
      %26 = sbr.rel (0) target = $region9
    $region8: #{tpu_custom_call.1} parent=1 // pred_region
      %s28 = ssub.s32 512, 512
      %29 = vsyncadd [#allocation6], %s28
      %s30 = sshll.u32 [#allocation5], 4
      %s31 = int_to_ptr.vmem [resolvable:$true] %s30
      %36 = dma.hbm_to_vmem [thread:$0]  %s1, 512, %s31, [#allocation6], 128, 128, 8
    $region9: #{tpu_custom_call.1} parent=1 // pred_fallthru
      _
    // Predicated region
    $region10: #{tpu_custom_call.1} parent=1 // pred_check
      _
    $region11: #{tpu_custom_call.1} parent=1 // pred_check_branch
      %38 = sbr.rel (0) target = $region13
    $region12: #{tpu_custom_call.1} parent=1 // pred_region
      %s40 = ssub.s32 512, 512
      %41 = vsyncadd [#allocation6], %s40
      %s42 = sshll.u32 [#allocation7], 4
      %s43 = int_to_ptr.vmem [resolvable:$true] %s42
      %48 = dma.hbm_to_vmem [thread:$0]  %s2, 512, %s43, [#allocation6], 128, 128, 8
    $region13: #{tpu_custom_call.1} parent=1 // pred_fallthru
      _
    // Predicated region
    $region14: #{tpu_custom_call.1} parent=1 // pred_check
      _
    $region15: #{tpu_custom_call.1} parent=1 // pred_check_branch
      %50 = sbr.rel (0) target = $region17
    $region16: #{tpu_custom_call.1} parent=1 // pred_region
      %s52 = ssub.s32 128, 128
      %53 = vsyncadd [#allocation9], %s52
      %s55 = sshll.u32 [#allocation8], 4
      %s56 = int_to_ptr.vmem [resolvable:$true] %s55
      %58 = dma.hbm_to_vmem [thread:$0]  %s3, 128, %s56, [#allocation9]
    $region17: #{tpu_custom_call.1} parent=1 // pred_fallthru
      _
    // Predicated region
    $region18: #{tpu_custom_call.1} parent=1 // pred_check
      _
    $region19: #{tpu_custom_call.1} parent=1 // pred_check_branch
      %60 = sbr.rel (0) target = $region21
    $region20: #{tpu_custom_call.1} parent=1 // pred_region
      %61 = dma.done [#allocation3], 512
    $region21: #{tpu_custom_call.1} parent=1 // pred_fallthru
      _
    // Predicated region
    $region22: #{tpu_custom_call.1} parent=1 // pred_check
      _
    $region23: #{tpu_custom_call.1} parent=1 // pred_check_branch
      %63 = sbr.rel (0) target = $region25
    $region24: #{tpu_custom_call.1} parent=1 // pred_region
      %64 = dma.done [#allocation6], 512
    $region25: #{tpu_custom_call.1} parent=1 // pred_fallthru
      _
    // Predicated region
    $region26: #{tpu_custom_call.1} parent=1 // pred_check
      _
    $region27: #{tpu_custom_call.1} parent=1 // pred_check_branch
      %66 = sbr.rel (0) target = $region29
    $region28: #{tpu_custom_call.1} parent=1 // pred_region
      %67 = dma.done [#allocation6], 512
    $region29: #{tpu_custom_call.1} parent=1 // pred_fallthru
      _
    // Predicated region
    $region30: #{tpu_custom_call.1} parent=1 // pred_check
      _
    $region31: #{tpu_custom_call.1} parent=1 // pred_check_branch
      %69 = sbr.rel (0) target = $region33
    $region32: #{tpu_custom_call.1} parent=1 // pred_region
      %70 = dma.done [#allocation9], 128
    $region33: #{tpu_custom_call.1} parent=1 // pred_fallthru
      _
    %v71 = vld [vmem:[#allocation2] sm:$0xff]
    %v72 = vld [vmem:[#allocation2 + $0x8] sm:$0xff]
    %v73 = vld [vmem:[#allocation2 + $0x10] sm:$0xff]
    %v74 = vld [vmem:[#allocation2 + $0x18] sm:$0xff]
    %v75 = vld [vmem:[#allocation5] sm:$0xff]
    %v76 = vld [vmem:[#allocation5 + $0x8] sm:$0xff]
    %v77 = vld [vmem:[#allocation5 + $0x10] sm:$0xff]
    %v78 = vld [vmem:[#allocation5 + $0x18] sm:$0xff]
    %v79 = vld [vmem:[#allocation7] sm:$0xff]
    %v80 = vld [vmem:[#allocation7 + $0x8] sm:$0xff]
    %v81 = vld [vmem:[#allocation7 + $0x10] sm:$0xff]
    %v82 = vld [vmem:[#allocation7 + $0x18] sm:$0xff]
    %v83 = vld [vmem:[#allocation8] sm:$0xff]
    %v84 = vunpack.c.0.s8 %v83
    %v85 = vunpack.c.1.s8 %v83
    %v86 = vunpack.c.2.s8 %v83
    %v87 = vunpack.c.3.s8 %v83
    %v88 = vcvt.s32.f32 %v84
    %v89 = vcvt.s32.f32 %v85
    %v90 = vcvt.s32.f32 %v86
    %v91 = vcvt.s32.f32 %v87
    %v92 = vmax.f32 %v71, 1e-06
    %v93 = vmax.f32 %v72, 1e-06
    %v94 = vmax.f32 %v73, 1e-06
    %v95 = vmax.f32 %v74, 1e-06
    %v96 = vmax.f32 %v79, 1e-06
    %v97 = vmax.f32 %v80, 1e-06
    %v98 = vmax.f32 %v81, 1e-06
    %v99 = vmax.f32 %v82, 1e-06
    %v100 = vlog2.pop %v96
    %v101 = vmul.f32 %v100, 0.6931472
    %v102 = vlog2.pop %v97
    %v103 = vmul.f32 %v102, 0.6931472
    %v104 = vlog2.pop %v98
    %v105 = vmul.f32 %v104, 0.6931472
    %v106 = vlog2.pop %v99
    %v107 = vmul.f32 %v106, 0.6931472
    %v108 = vlog2.pop %v92
    %v109 = vmul.f32 %v108, 0.6931472
    %v110 = vlog2.pop %v93
    %v111 = vmul.f32 %v110, 0.6931472
    %v112 = vlog2.pop %v94
    %v113 = vmul.f32 %v112, 0.6931472
    %v114 = vlog2.pop %v95
    %v115 = vmul.f32 %v114, 0.6931472
    %v116 = vsub.f32 %v101, %v109
    %v117 = vsub.f32 %v103, %v111
    %v118 = vsub.f32 %v105, %v113
    %v119 = vsub.f32 %v107, %v115
    %v120 = vmul.f32 %v116, %v88
    %v121 = vmul.f32 %v117, %v89
    %v122 = vmul.f32 %v118, %v90
    %v123 = vmul.f32 %v119, %v91
    %v124 = vmul.f32 %v92, %v88
    %v125 = vmul.f32 %v93, %v89
    %v126 = vmul.f32 %v94, %v90
    %v127 = vmul.f32 %v95, %v91
    %v128 = vmul.f32 %v96, %v88
    %v129 = vmul.f32 %v97, %v89
    %v130 = vmul.f32 %v98, %v90
    %v131 = vmul.f32 %v99, %v91
    %v132 = vadd.f32 %v88, %v89
    %v133 = vadd.f32 %v132, %v90
    %v134 = vadd.f32 %v133, %v91
    %v135 = vrot.slane %v134, 4
    %v136 = vadd.f32 %v134, %v135
    %v137 = vrot.slane %v136, 2
    %v138 = vadd.f32 %v136, %v137
    %v139 = vrot.slane %v138, 1
    %v140 = vadd.f32 %v138, %v139
    %v141 = vsub.f32 1e-06, %v71
    %v142 = vsub.f32 1e-06, %v72
    %v143 = vsub.f32 1e-06, %v73
    %v144 = vsub.f32 1e-06, %v74
    %v145 = vmax.f32 %v141, 0.0
    %v146 = vmax.f32 %v142, 0.0
    %v147 = vmax.f32 %v143, 0.0
    %v148 = vmax.f32 %v144, 0.0
    %v149 = vadd.f32 %v145, %v146
    %v150 = vadd.f32 %v149, %v147
    %v151 = vadd.f32 %v150, %v148
    %v152 = vrot.slane %v151, 4
    %v153 = vadd.f32 %v151, %v152
    %v154 = vrot.slane %v153, 2
    %v155 = vadd.f32 %v153, %v154
    %v156 = vrot.slane %v155, 1
    %v157 = vadd.f32 %v155, %v156
    %v158 = vadd.f32 %v120, %v121
    %v159 = vadd.f32 %v158, %v122
    %v160 = vadd.f32 %v159, %v123
    %v161 = vrot.slane %v160, 4
    %v162 = vadd.f32 %v160, %v161
    %v163 = vrot.slane %v162, 2
    %v164 = vadd.f32 %v162, %v163
    %v165 = vrot.slane %v164, 1
    %v166 = vadd.f32 %v164, %v165
    %v167 = vmul.f32 %v120, %v120
    %v168 = vmul.f32 %v121, %v121
    %v169 = vmul.f32 %v122, %v122
    %v170 = vmul.f32 %v123, %v123
    %v171 = vadd.f32 %v167, %v168
    %v172 = vadd.f32 %v171, %v169
    %v173 = vadd.f32 %v172, %v170
    %v174 = vrot.slane %v173, 4
    %v175 = vadd.f32 %v173, %v174
    %v176 = vrot.slane %v175, 2
    %v177 = vadd.f32 %v175, %v176
    %v178 = vrot.slane %v177, 1
    %v179 = vadd.f32 %v177, %v178
    %v180 = vadd.f32 %v124, %v125
    %v181 = vadd.f32 %v180, %v126
    %v182 = vadd.f32 %v181, %v127
    %v183 = vrot.slane %v182, 4
    %v184 = vadd.f32 %v182, %v183
    %v185 = vrot.slane %v184, 2
    %v186 = vadd.f32 %v184, %v185
    %v187 = vrot.slane %v186, 1
    %v188 = vadd.f32 %v186, %v187
    %v189 = vadd.f32 %v128, %v129
    %v190 = vadd.f32 %v189, %v130
    %v191 = vadd.f32 %v190, %v131
    %v192 = vrot.slane %v191, 4
    %v193 = vadd.f32 %v191, %v192
    %v194 = vrot.slane %v193, 2
    %v195 = vadd.f32 %v193, %v194
    %v196 = vrot.slane %v195, 1
    %v197 = vadd.f32 %v195, %v196
    %v198 = vsub.f32 0.0, %v75
    %v199 = vsub.f32 0.0, %v76
    %v200 = vsub.f32 0.0, %v77
    %v201 = vsub.f32 0.0, %v78
    %v202 = vmul.f32 %v198, 1.442695
    %v203 = vpow.pop %v202
    %v204 = vmul.f32 %v199, 1.442695
    %v205 = vpow.pop %v204
    %v206 = vmul.f32 %v200, 1.442695
    %v207 = vpow.pop %v206
    %v208 = vmul.f32 %v201, 1.442695
    %v209 = vpow.pop %v208
    %v210 = vadd.f32 %v203, %v205
    %v211 = vadd.f32 %v210, %v207
    %v212 = vadd.f32 %v211, %v209
    %v213 = vrot.slane %v212, 4
    %v214 = vadd.f32 %v212, %v213
    %v215 = vrot.slane %v214, 2
    %v216 = vadd.f32 %v214, %v215
    %v217 = vrot.slane %v216, 1
    %v218 = vadd.f32 %v216, %v217
    %v219 = vadd.f32 %v75, %v76
    %v220 = vadd.f32 %v219, %v77
    %v221 = vadd.f32 %v220, %v78
    %v222 = vrot.slane %v221, 4
    %v223 = vadd.f32 %v221, %v222
    %v224 = vrot.slane %v223, 2
    %v225 = vadd.f32 %v223, %v224
    %v226 = vrot.slane %v225, 1
    %v227 = vadd.f32 %v225, %v226
    %228 = vst [vmem:[#allocation10] sm:$0x1] %v157
    %229 = vst [vmem:[#allocation10 + $0x1] sm:$0x1] %v166
    %230 = vst [vmem:[#allocation10 + $0x2] sm:$0x1] %v179
    %231 = vst [vmem:[#allocation10 + $0x3] sm:$0x1] %v188
    %232 = vst [vmem:[#allocation10 + $0x4] sm:$0x1] %v197
    %233 = vst [vmem:[#allocation10 + $0x5] sm:$0x1] %v140
    %234 = vst [vmem:[#allocation10 + $0x6] sm:$0x1] %v218
    %235 = vst [vmem:[#allocation10 + $0x7] sm:$0x1] %v227
    // Predicated region
    $region34: #{tpu_custom_call.1} parent=1 // pred_check
      _
    $region35: #{tpu_custom_call.1} parent=1 // pred_check_branch
      %237 = sbr.rel (0) target = $region37
    $region36: #{tpu_custom_call.1} parent=1 // pred_region
      %s239 = ssub.s32 128, 128
      %240 = vsyncadd [#allocation4], %s239
      %s242 = sshll.u32 [#allocation10], 4
      %s243 = int_to_ptr.vmem [resolvable:$true] %s242
      %245 = dma.vmem_to_hbm [thread:$0]  %s243, 128, %s4, [#allocation4]
    $region37: #{tpu_custom_call.1} parent=1 // pred_fallthru
      _
    // Predicated region
    $region38: #{tpu_custom_call.1} parent=1 // pred_check
      _
    $region39: #{tpu_custom_call.1} parent=1 // pred_check_branch
      %247 = sbr.rel (0) target = $region41
    $region40: #{tpu_custom_call.1} parent=1 // pred_region
      %248 = dma.done [#allocation4], 128
    $region41: #{tpu_custom_call.1} parent=1 // pred_fallthru
      _
    %249 = vsyncpa [#allocation3], 1
    %250 = vsyncpa [#allocation6], 1
    %251 = vsyncpa [#allocation9], 1
    %252 = vsyncpa [#allocation4], 1

</llo_original>
